<compile_context>
chip_gen: v6e
topology: v6e:2x2x1
jax: 0.10.0
libtpu: 0.0.40
codegen_flags: <defaults>
</compile_context>

<pallas_src>
import jax
import jax.numpy as jnp
from jax.experimental import pallas as pl
from jax.experimental.pallas import tpu as pltpu


def _round_up(x, m):
    return ((x + m - 1) // m) * m


def _tile_bytes(rows, cols, dtype):
    """VMEM footprint of a (rows, cols) tile including sublane/lane layout padding."""
    it = jnp.dtype(dtype).itemsize
    sub = max(8, 32 // it)  # sublane packing multiple: 8 (f32), 16 (bf16), 32 (int8)
    return _round_up(max(rows, 1), sub) * _round_up(max(cols, 1), 128) * it


def _default_vmem_limit():
    # Half the physical VMEM (<= 96 MiB): ~64 MiB on v5e/v6e (128 MiB physical),
    # ~32 MiB on v7x (64 MiB per TensorCore). Conservative 48 MiB fallback.
    try:
        info = pltpu.get_tpu_info()
        cap = getattr(info, "vmem_capacity_bytes", None)
        if cap:
            return min(int(cap) // 2, 96 * 1024 * 1024)
    except Exception:
        pass
    return 48 * 1024 * 1024


def ff_kernel(x_ref, w_ref, b_ref, o_ref):
    # Hardtanh(0, 20) -> Linear (x @ W_t + b). Dropout(p) in eval mode == identity.
    x = jnp.clip(x_ref[...], 0.0, 20.0)
    y = jnp.dot(x, w_ref[...], preferred_element_type=jnp.float32)
    o_ref[...] = (y + b_ref[...]).astype(o_ref.dtype)


def ff_kernel_ktiled(x_ref, w_ref, b_ref, o_ref, acc_ref):
    # Same computation with a K (feature) reduction grid axis and an f32 accumulator.
    k = pl.program_id(2)

    @pl.when(k == 0)
    def _():
        acc_ref[...] = jnp.zeros_like(acc_ref)

    x = jnp.clip(x_ref[...], 0.0, 20.0)
    acc_ref[...] += jnp.dot(x, w_ref[...], preferred_element_type=jnp.float32)

    @pl.when(k == pl.num_programs(2) - 1)
    def _():
        o_ref[...] = (acc_ref[...] + b_ref[...]).astype(o_ref.dtype)


def prepare_ff_params(weight, bias, *, max_tile_k=2048):
    """One-time parameter prep (do at parameter-load time, not per call):
    transpose to (K, N) MXU layout, pad N to a 128-lane multiple only if needed,
    and pad K only if the feature dim will be grid-tiled."""
    n_hidden, n_feats = weight.shape
    n_pad = _round_up(n_hidden, 128)

    if n_feats > max_tile_k:
        tile_k = _round_up(max_tile_k, 128)
        k_pad = _round_up(n_feats, tile_k)
    else:
        tile_k = n_feats
        k_pad = n_feats

    w_t = weight.T  # (n_feats, n_hidden): native (K, N) for the MXU
    if k_pad != n_feats or n_pad != n_hidden:
        w_t = jnp.pad(w_t, ((0, k_pad - n_feats), (0, n_pad - n_hidden)))
    b = bias if n_pad == n_hidden else jnp.pad(bias, (0, n_pad - n_hidden))
    return {
        "w_t": w_t,                  # (k_pad, n_pad)
        "b2d": b.reshape(1, n_pad),  # (1, n_pad)
        "n_hidden": n_hidden,
        "n_feats": n_feats,
        "n_pad": n_pad,
        "tile_k": tile_k,
        "k_pad": k_pad,
    }


def _plan_tiles(M, tile_k, n_pad, k_tiled, x_dtype, w_dtype, b_dtype, out_dtype,
                vmem_limit_bytes, single_buffer_params):
    budget = int(0.8 * vmem_limit_bytes)
    x_it = jnp.dtype(x_dtype).itemsize
    o_it = jnp.dtype(out_dtype).itemsize
    sub_m = max(8, 32 // x_it)

    # Weight needs double buffering only when its block index changes along the inner
    # (K) axis; the bias block is constant across the inner axis in both cases.
    w_bufs = 2 if (k_tiled or not single_buffer_params) else 1
    b_bufs = 1 if single_buffer_params else 2

    lanes_k = _round_up(tile_k, 128)

    def total_bytes(tile_m, tile_n):
        t = 2 * _tile_bytes(tile_m, tile_k, x_dtype)        # x (double-buffered)
        t += 2 * _tile_bytes(tile_m, tile_n, out_dtype)     # out (double-buffered)
        t += w_bufs * _tile_bytes(tile_k, tile_n, w_dtype)  # weight
        t += b_bufs * _tile_bytes(1, tile_n, b_dtype)       # bias
        if k_tiled:
            t += _tile_bytes(tile_m, tile_n, jnp.float32)   # accumulator scratch
        return t

    # Prefer the full weight resident (x streamed exactly once); split N only if forced.
    tile_n = n_pad
    while tile_n > 128 and total_bytes(sub_m, tile_n) > budget:
        tile_n = max(128, (tile_n // 2) // 128 * 128)
    lanes_n = _round_up(tile_n, 128)

    fixed = (w_bufs * _tile_bytes(tile_k, tile_n, w_dtype)
             + b_bufs * _tile_bytes(1, tile_n, b_dtype))
    per_row = 2 * lanes_k * x_it + 2 * lanes_n * o_it + (4 * lanes_n if k_tiled else 0)
    avail = budget - fixed
    tile_m = avail // per_row if avail > 0 else sub_m
    tile_m = int(max(sub_m, min(tile_m, 4096, _round_up(M, sub_m))))
    tile_m = (tile_m // sub_m) * sub_m

    # >= 2 grid steps per TensorCore (v7x has 2 TCs) whenever the row count allows.
    n_blocks = pl.cdiv(n_pad, tile_n)
    target_m_blocks = max(1, -(-4 // n_blocks))
    if M > target_m_blocks * sub_m and pl.cdiv(M, tile_m) < target_m_blocks:
        tile_m = max(sub_m, _round_up(pl.cdiv(M, target_m_blocks), sub_m))
    return tile_m, tile_n


def ff_forward(x, params, *, vmem_limit_bytes=None, out_dtype=None):
    """FF forward: Hardtanh(0,20) -> Linear -> Dropout (eval). x: (..., n_feats)."""
    if vmem_limit_bytes is None:
        vmem_limit_bytes = _default_vmem_limit()
    out_dtype = x.dtype if out_dtype is None else out_dtype

    w_t, b2d = params["w_t"], params["b2d"]
    n_hidden, n_feats = params["n_hidden"], params["n_feats"]
    n_pad, tile_k, k_pad = params["n_pad"], params["tile_k"], params["k_pad"]

    orig_shape = x.shape
    assert orig_shape[-1] == n_feats, (orig_shape, n_feats)
    x2d = x.reshape(-1, n_feats)
    M = x2d.shape[0]

    n_k_blocks = k_pad // tile_k
    k_tiled = n_k_blocks > 1
    if k_pad != n_feats:
        # TODO(synk): when the feature dim is grid-tiled, the producer should emit
        # K-padded features so this per-call pad disappears.
        x2d = jnp.pad(x2d, ((0, 0), (0, k_pad - n_feats)))

    cost = pl.CostEstimate(
        flops=2 * M * n_pad * k_pad,
        transcendentals=0,
        bytes_accessed=(x2d.size * x2d.dtype.itemsize
                        + w_t.size * w_t.dtype.itemsize
                        + b2d.size * b2d.dtype.itemsize
                        + M * n_pad * jnp.dtype(out_dtype).itemsize),
    )

    def run(single_buffer_params):
        tile_m, tile_n = _plan_tiles(
            M, tile_k, n_pad, k_tiled, x2d.dtype, w_t.dtype, b2d.dtype, out_dtype,
            vmem_limit_bytes, single_buffer_params)
        pm = pl.Buffered(1) if single_buffer_params else None

        if k_tiled:
            grid = (pl.cdiv(n_pad, tile_n), pl.cdiv(M, tile_m), n_k_blocks)
            in_specs = [
                pl.BlockSpec((tile_m, tile_k), lambda n, m, k: (m, k)),
                pl.BlockSpec((tile_k, tile_n), lambda n, m, k: (k, n)),
                pl.BlockSpec((1, tile_n), lambda n, m, k: (0, n), pipeline_mode=pm),
            ]
            out_specs = pl.BlockSpec((tile_m, tile_n), lambda n, m, k: (m, n))
            scratch = [pltpu.VMEM((tile_m, tile_n), jnp.float32)]
            kernel = ff_kernel_ktiled
            semantics = ("parallel", "parallel", "arbitrary")
        else:
            grid = (pl.cdiv(n_pad, tile_n), pl.cdiv(M, tile_m))
            in_specs = [
                pl.BlockSpec((tile_m, tile_k), lambda n, m: (m, 0)),
                pl.BlockSpec((tile_k, tile_n), lambda n, m: (0, n), pipeline_mode=pm),
                pl.BlockSpec((1, tile_n), lambda n, m: (0, n), pipeline_mode=pm),
            ]
            out_specs = pl.BlockSpec((tile_m, tile_n), lambda n, m: (m, n))
            scratch = []
            kernel = ff_kernel
            semantics = ("parallel", "parallel")

        return pl.pallas_call(
            kernel,
            out_shape=jax.ShapeDtypeStruct((M, n_pad), out_dtype),
            grid_spec=pltpu.PrefetchScalarGridSpec(
                num_scalar_prefetch=0,
                grid=grid,
                in_specs=in_specs,
                out_specs=out_specs,
                scratch_shapes=scratch,
            ),
            compiler_params=pltpu.CompilerParams(
                dimension_semantics=semantics,
                vmem_limit_bytes=vmem_limit_bytes,
            ),
            cost_estimate=cost,
        )(x2d, w_t, b2d)

    try:
        out2d = run(True)
    except Exception:
        # TODO(synk): fallback for jax versions that reject pl.Buffered(1).
        out2d = run(False)

    if n_pad != n_hidden:
        # TODO(synk): let the consumer take the padded (lane-dense) output to avoid this
        # extra HBM pass when n_hidden % 128 != 0.
        out2d = out2d[:, :n_hidden]
    return out2d.reshape(*orig_shape[:-1], n_hidden)


if __name__ == "__main__":
    k1, k2, k3, k4, k5, k6 = jax.random.split(jax.random.PRNGKey(0), 6)

    # --- Case 1: FF at small shapes (single K block, N padded 64 -> 128 and sliced) ---
    batch, seq, n_feats, n_hidden = 2, 8, 32, 64
    limit = 1.0 / jnp.sqrt(jnp.float32(n_feats))
    weight = jax.random.uniform(k1, (n_hidden, n_feats), jnp.float32, -limit, limit)
    bias = jax.random.uniform(k2, (n_hidden,), jnp.float32, -limit, limit)
    # Input spans negative / positive / large values to exercise the Hardtanh clamp.
    x = jax.random.uniform(k3, (batch, seq, n_feats), jnp.float32, -5.0, 25.0)

    params = prepare_ff_params(weight, bias)
    out = ff_forward(x, params)
    jax.block_until_ready(out)

    ref = jnp.clip(x, 0.0, 20.0) @ weight.T + bias
    assert out.shape == (batch, seq, n_hidden), out.shape
    assert jnp.allclose(out, ref, atol=1e-5, rtol=1e-5), float(jnp.max(jnp.abs(out - ref)))

    # --- Case 2: force the K-tiled accumulator path (max_tile_k=128 on n_feats=256) ---
    n_feats2, n_hidden2 = 256, 128
    limit2 = 1.0 / jnp.sqrt(jnp.float32(n_feats2))
    weight2 = jax.random.uniform(k4, (n_hidden2, n_feats2), jnp.float32, -limit2, limit2)
    bias2 = jax.random.uniform(k5, (n_hidden2,), jnp.float32, -limit2, limit2)
    x2 = jax.random.uniform(k6, (batch, seq, n_feats2), jnp.float32, -5.0, 25.0)

    params2 = prepare_ff_params(weight2, bias2, max_tile_k=128)
    out2 = ff_forward(x2, params2)
    jax.block_until_ready(out2)

    ref2 = jnp.clip(x2, 0.0, 20.0) @ weight2.T + bias2
    assert out2.shape == (batch, seq, n_hidden2), out2.shape
    assert jnp.allclose(out2, ref2, atol=1e-4, rtol=1e-5), float(jnp.max(jnp.abs(out2 - ref2)))

    print("KERNEL_OK")
</pallas_src>

<mosaic_0001>
module attributes {stable_mosaic.version = 11 : i64} {
  func.func @ff_kernel(%arg0: i32, %arg1: i32, %arg2: memref<16x32xf32, #tpu.memory_space<vmem>>, %arg3: memref<32x128xf32, #tpu.memory_space<vmem>>, %arg4: memref<1x128xf32, #tpu.memory_space<vmem>>, %arg5: memref<16x128xf32, #tpu.memory_space<vmem>>) attributes {dimension_semantics = [#tpu.dimension_semantics<parallel>, #tpu.dimension_semantics<parallel>], iteration_bounds = array<i64: 1, 1>, scalar_prefetch = 0 : i64, scratch_operands = 0 : i64, tpu.core_type = #tpu.core_type<tc>, window_params = [{transform_indices = @transform_0, window_bounds = array<i64: 16, 32>}, {pipeline_mode = #tpu.pipeline_mode<synchronous>, transform_indices = @transform_1, window_bounds = array<i64: 32, 128>}, {pipeline_mode = #tpu.pipeline_mode<synchronous>, transform_indices = @transform_2, window_bounds = array<i64: 1, 128>}, {transform_indices = @transform_3, window_bounds = array<i64: 16, 128>}]} {
    %c0 = arith.constant 0 : index
    %c0_0 = arith.constant 0 : index
    %0 = vector.load %arg2[%c0, %c0_0] : memref<16x32xf32, #tpu.memory_space<vmem>>, vector<16x32xf32>
    %cst = arith.constant 0.000000e+00 : f32
    %cst_1 = arith.constant 2.000000e+01 : f32
    %1 = vector.broadcast %cst : f32 to vector<16x32xf32>
    %2 = arith.maximumf %1, %0 : vector<16x32xf32>
    %3 = vector.broadcast %cst_1 : f32 to vector<16x32xf32>
    %4 = arith.minimumf %3, %2 : vector<16x32xf32>
    %c0_2 = arith.constant 0 : index
    %c0_3 = arith.constant 0 : index
    %5 = vector.load %arg3[%c0_2, %c0_3] : memref<32x128xf32, #tpu.memory_space<vmem>>, vector<32x128xf32>
    %cst_4 = arith.constant dense<0.000000e+00> : vector<16x128xf32>
    %6 = tpu.matmul %4, %5, %cst_4 {dimension_numbers = #tpu.dot_dimension_numbers<[1], [0], [0], [1], [0, 0, 1, 1], [], []>} : vector<16x32xf32>, vector<32x128xf32>, vector<16x128xf32> -> vector<16x128xf32>
    %c0_5 = arith.constant 0 : index
    %c0_6 = arith.constant 0 : index
    %7 = vector.load %arg4[%c0_5, %c0_6] : memref<1x128xf32, #tpu.memory_space<vmem>>, vector<1x128xf32>
    %8 = vector.broadcast %7 : vector<1x128xf32> to vector<16x128xf32>
    %9 = arith.addf %6, %8 : vector<16x128xf32>
    %c0_7 = arith.constant 0 : index
    %c0_8 = arith.constant 0 : index
    %10 = vector.load %arg5[%c0_7, %c0_8] : memref<16x128xf32, #tpu.memory_space<vmem>>, vector<16x128xf32>
    tpu.vector_store %arg5[%c0_7, %c0_8], %9 {strides = array<i32>} : memref<16x128xf32, #tpu.memory_space<vmem>>, vector<16x128xf32>,
    return
  }
  func.func @transform_0(%arg0: i32, %arg1: i32) -> (i32, i32) {
    %c0_i32 = arith.constant 0 : i32
    %c0_i32_0 = arith.constant 0 : i32
    return %arg1, %c0_i32 : i32, i32
  }
  func.func @transform_1(%arg0: i32, %arg1: i32) -> (i32, i32) {
    %c0_i32 = arith.constant 0 : i32
    %c0_i32_0 = arith.constant 0 : i32
    return %c0_i32, %arg0 : i32, i32
  }
  func.func @transform_2(%arg0: i32, %arg1: i32) -> (i32, i32) {
    %c0_i32 = arith.constant 0 : i32
    %c0_i32_0 = arith.constant 0 : i32
    return %c0_i32, %arg0 : i32, i32
  }
  func.func @transform_3(%arg0: i32, %arg1: i32) -> (i32, i32) {
    %c0_i32 = arith.constant 0 : i32
    return %arg1, %arg0 : i32, i32
  }
}

module attributes {stable_mosaic.version = 11 : i64} {
  func.func @ff_kernel(%arg0: i32, %arg1: i32, %arg2: memref<16x32xf32, #tpu.memory_space<vmem>>, %arg3: memref<32x128xf32, #tpu.memory_space<vmem>>, %arg4: memref<1x128xf32, #tpu.memory_space<vmem>>, %arg5: memref<16x128xf32, #tpu.memory_space<vmem>>) attributes {dimension_semantics = [#tpu.dimension_semantics<parallel>, #tpu.dimension_semantics<parallel>], iteration_bounds = array<i64: 1, 1>, scalar_prefetch = 0 : i64, scratch_operands = 0 : i64, tpu.core_type = #tpu.core_type<tc>, window_params = [{transform_indices = @transform_0, window_bounds = array<i64: 16, 32>}, {transform_indices = @transform_1, window_bounds = array<i64: 32, 128>}, {transform_indices = @transform_2, window_bounds = array<i64: 1, 128>}, {transform_indices = @transform_3, window_bounds = array<i64: 16, 128>}]} {
    %c0 = arith.constant 0 : index
    %c0_0 = arith.constant 0 : index
    %0 = vector.load %arg2[%c0, %c0_0] : memref<16x32xf32, #tpu.memory_space<vmem>>, vector<16x32xf32>
    %cst = arith.constant 0.000000e+00 : f32
    %cst_1 = arith.constant 2.000000e+01 : f32
    %1 = vector.broadcast %cst : f32 to vector<16x32xf32>
    %2 = arith.maximumf %1, %0 : vector<16x32xf32>
    %3 = vector.broadcast %cst_1 : f32 to vector<16x32xf32>
    %4 = arith.minimumf %3, %2 : vector<16x32xf32>
    %c0_2 = arith.constant 0 : index
    %c0_3 = arith.constant 0 : index
    %5 = vector.load %arg3[%c0_2, %c0_3] : memref<32x128xf32, #tpu.memory_space<vmem>>, vector<32x128xf32>
    %cst_4 = arith.constant dense<0.000000e+00> : vector<16x128xf32>
    %6 = tpu.matmul %4, %5, %cst_4 {dimension_numbers = #tpu.dot_dimension_numbers<[1], [0], [0], [1], [0, 0, 1, 1], [], []>} : vector<16x32xf32>, vector<32x128xf32>, vector<16x128xf32> -> vector<16x128xf32>
    %c0_5 = arith.constant 0 : index
    %c0_6 = arith.constant 0 : index
    %7 = vector.load %arg4[%c0_5, %c0_6] : memref<1x128xf32, #tpu.memory_space<vmem>>, vector<1x128xf32>
    %8 = vector.broadcast %7 : vector<1x128xf32> to vector<16x128xf32>
    %9 = arith.addf %6, %8 : vector<16x128xf32>
    %c0_7 = arith.constant 0 : index
    %c0_8 = arith.constant 0 : index
    %10 = vector.load %arg5[%c0_7, %c0_8] : memref<16x128xf32, #tpu.memory_space<vmem>>, vector<16x128xf32>
    tpu.vector_store %arg5[%c0_7, %c0_8], %9 {strides = array<i32>} : memref<16x128xf32, #tpu.memory_space<vmem>>, vector<16x128xf32>,
    return
  }
  func.func @transform_0(%arg0: i32, %arg1: i32) -> (i32, i32) {
    %c0_i32 = arith.constant 0 : i32
    %c0_i32_0 = arith.constant 0 : i32
    return %arg1, %c0_i32 : i32, i32
  }
  func.func @transform_1(%arg0: i32, %arg1: i32) -> (i32, i32) {
    %c0_i32 = arith.constant 0 : i32
    %c0_i32_0 = arith.constant 0 : i32
    return %c0_i32, %arg0 : i32, i32
  }
  func.func @transform_2(%arg0: i32, %arg1: i32) -> (i32, i32) {
    %c0_i32 = arith.constant 0 : i32
    %c0_i32_0 = arith.constant 0 : i32
    return %c0_i32, %arg0 : i32, i32
  }
  func.func @transform_3(%arg0: i32, %arg1: i32) -> (i32, i32) {
    %c0_i32 = arith.constant 0 : i32
    return %arg1, %arg0 : i32, i32
  }
}

</mosaic_0001>

<llo_original>
// kernel: tpu_custom_call.1
$region0: #{tpu_custom_call.1}
  #allocation0 [shape = 'u32[]', space=smem, size = 0x4, offset = 0x4, fixed_abs, tag = 'smem constant byte address 0x4 - core index']
  #allocation1 [shape = 'u32[144,128]{1,0:T(1,128)}', space=vmem, size = 0x12000, scoped, tag = 'internal scratch']
  %s0 = inlined_call_operand.hbm [shape: f32[16,32], index: 0, kind: input, shape index: {}]
  %s1 = inlined_call_operand.hbm [shape: f32[32,128], index: 1, kind: input, shape index: {}]
  %s2 = inlined_call_operand.vmem [shape: f32[1,128], index: 2, kind: input, shape index: {}]
  %s3 = inlined_call_operand.hbm [shape: f32[16,128], index: 3, kind: output, shape index: {}]
  %s4 = sld [smem:[#allocation0]]
  $region30: #{tpu_custom_call.1} parent=0
    _
  %s6 = ssub.s32 1, %s4
  %s7 = scalar_select 0, %s6, %s4
  $region1: #{tpu_custom_call.1} parent=0
    #allocation2 [shape = 'u8[8192]{0}', space=vmem, size = 0x2000, scoped, tag = 'input window, operand 0, single buffered']
    #allocation3 [shape = 's32[1]{0}', space=sflag, size = 0x4, scoped, tag = 'scoped memory for tpu_custom_call.1']
    #allocation4 [shape = 's32[1]{0}', space=sflag, size = 0x4, scoped, tag = 'scoped memory for tpu_custom_call.1']
    #allocation5 [shape = 'u8[16384]{0}', space=vmem, size = 0x4000, scoped, tag = 'input window, operand 1, single buffered']
    #allocation6 [shape = 's32[1]{0}', space=sflag, size = 0x4, scoped, tag = 'scoped memory for tpu_custom_call.1']
    #allocation7 [shape = 'u8[8192]{0}', space=vmem, size = 0x2000, scoped, tag = 'output window, operand 0, single buffered']
    %8 = vsyncpa [#allocation3], 0
    %9 = vsyncpa [#allocation6], 0
    %10 = vsyncpa [#allocation4], 0
    // Predicated region
    $region2: #{tpu_custom_call.1} parent=1 // pred_check
      _
    $region3: #{tpu_custom_call.1} parent=1 // pred_check_branch
      %12 = sbr.rel (0) target = $region5
    $region4: #{tpu_custom_call.1} parent=1 // pred_region
      %s14 = ssub.s32 256, 256
      %15 = vsyncadd [#allocation3], %s14
      %s16 = sshll.u32 [#allocation2], 4
      %s17 = int_to_ptr.vmem [resolvable:$true] %s16
      %22 = dma.hbm_to_vmem [thread:$0]  %s0, 256, %s17, [#allocation3], 128, 128, 8
    $region5: #{tpu_custom_call.1} parent=1 // pred_fallthru
      _
    // Predicated region
    $region6: #{tpu_custom_call.1} parent=1 // pred_check
      _
    $region7: #{tpu_custom_call.1} parent=1 // pred_check_branch
      %24 = sbr.rel (0) target = $region9
    $region8: #{tpu_custom_call.1} parent=1 // pred_region
      %s26 = ssub.s32 512, 512
      %27 = vsyncadd [#allocation6], %s26
      %s28 = sshll.u32 [#allocation5], 4
      %s29 = int_to_ptr.vmem [resolvable:$true] %s28
      %34 = dma.hbm_to_vmem [thread:$0]  %s1, 512, %s29, [#allocation6], 128, 128, 8
    $region9: #{tpu_custom_call.1} parent=1 // pred_fallthru
      _
    // Predicated region
    $region10: #{tpu_custom_call.1} parent=1 // pred_check
      _
    $region11: #{tpu_custom_call.1} parent=1 // pred_check_branch
      %36 = sbr.rel (0) target = $region13
    $region12: #{tpu_custom_call.1} parent=1 // pred_region
      _
    $region13: #{tpu_custom_call.1} parent=1 // pred_fallthru
      _
    // Predicated region
    $region14: #{tpu_custom_call.1} parent=1 // pred_check
      _
    $region15: #{tpu_custom_call.1} parent=1 // pred_check_branch
      %38 = sbr.rel (0) target = $region17
    $region16: #{tpu_custom_call.1} parent=1 // pred_region
      %39 = dma.done [#allocation3], 256
    $region17: #{tpu_custom_call.1} parent=1 // pred_fallthru
      _
    // Predicated region
    $region18: #{tpu_custom_call.1} parent=1 // pred_check
      _
    $region19: #{tpu_custom_call.1} parent=1 // pred_check_branch
      %41 = sbr.rel (0) target = $region21
    $region20: #{tpu_custom_call.1} parent=1 // pred_region
      %42 = dma.done [#allocation6], 512
    $region21: #{tpu_custom_call.1} parent=1 // pred_fallthru
      _
    %v43 = vld [vmem:[#allocation2] sm:$0xff]
    %v44 = vld [vmem:[#allocation2 + $0x8] sm:$0xff]
    %v45 = vmax.f32 %v43, 0.0
    %v46 = vmax.f32 %v44, 0.0
    %v47 = vmin.f32 %v45, 20.0
    %v48 = vmin.f32 %v46, 20.0
    %v49 = vld [vmem:[#allocation5] sm:$0xff]
    %v50 = vld [vmem:[#allocation5 + $0x8] sm:$0xff]
    %v51 = vld [vmem:[#allocation5 + $0x10] sm:$0xff]
    %v52 = vld [vmem:[#allocation5 + $0x18] sm:$0xff]
    %v53 = vld [vmem:[%s2] sm:$0x1]
    %v55 = vlaneseq
    %v56 = vshrl.u32 %v55, 7
    %v57 = vsub.s32 0, %v56
    %v58 = vrot.slane %v53, %v57
    %vm60 = vcmask 261120
    %v62 = vsel %vm60, %v47, 0
    %v65 = vsel %vm60, %v48, 0
    %67 = vmatprep.subr.mxu0 0.0
    %68 = vmatpush1.msra.mxu0 0.0
    %69 = vmatprep.subr.mxu0 0.0
    %70 = vmatpush1.msra.mxu0 0.0
    %71 = vmatprep.subr.mxu0 0.0
    %72 = vmatpush1.msra.mxu0 0.0
    %73 = vmatprep.subr.mxu0 0.0
    %74 = vmatpush1.msra.mxu0 0.0
    %75 = vmatprep.subr.mxu0 0.0
    %76 = vmatpush1.msra.mxu0 0.0
    %77 = vmatprep.subr.mxu0 0.0
    %78 = vmatpush1.msra.mxu0 0.0
    %79 = vmatprep.subr.mxu0 0.0
    %80 = vmatpush1.msra.mxu0 0.0
    %81 = vmatprep.subr.mxu0 0.0
    %82 = vmatpush1.msra.mxu0 0.0
    %83 = vmatprep.subr.mxu0 0.0
    %84 = vmatpush1.msra.mxu0 0.0
    %85 = vmatprep.subr.mxu0 0.0
    %86 = vmatpush1.msra.mxu0 0.0
    %87 = vmatprep.subr.mxu0 0.0
    %88 = vmatpush1.msra.mxu0 0.0
    %89 = vmatprep.subr.mxu0 0.0
    %90 = vmatpush1.msra.mxu0 0.0
    %91 = vmatprep.subr.mxu0 0.0
    %92 = vmatpush1.msra.mxu0 %v52
    %93 = vmatprep.subr.mxu0 0.0
    %94 = vmatpush1.msra.mxu0 %v51
    %95 = vmatprep.subr.mxu0 0.0
    %96 = vmatpush1.msra.mxu0 %v50
    %97 = vmatprep.subr.mxu0 0.0
    %98 = vmatpush1.msra.mxu0 %v49
    %99 = vmatprep.subr.mxu0 0.0
    %100 = vmatpush2.msra.mxu0 0.0
    %101 = vmatprep.subr.mxu0 0.0
    %102 = vmatpush2.msra.mxu0 0.0
    %103 = vmatprep.subr.mxu0 0.0
    %104 = vmatpush2.msra.mxu0 0.0
    %105 = vmatprep.subr.mxu0 0.0
    %106 = vmatpush2.msra.mxu0 0.0
    %107 = vmatprep.subr.mxu0 0.0
    %108 = vmatpush2.msra.mxu0 0.0
    %109 = vmatprep.subr.mxu0 0.0
    %110 = vmatpush2.msra.mxu0 0.0
    %111 = vmatprep.subr.mxu0 0.0
    %112 = vmatpush2.msra.mxu0 0.0
    %113 = vmatprep.subr.mxu0 0.0
    %114 = vmatpush2.msra.mxu0 0.0
    %115 = vmatprep.subr.mxu0 0.0
    %116 = vmatpush2.msra.mxu0 0.0
    %117 = vmatprep.subr.mxu0 0.0
    %118 = vmatpush2.msra.mxu0 0.0
    %119 = vmatprep.subr.mxu0 0.0
    %120 = vmatpush2.msra.mxu0 0.0
    %121 = vmatprep.subr.mxu0 0.0
    %122 = vmatpush2.msra.mxu0 0.0
    %123 = vmatprep.subr.mxu0 0.0
    %124 = vmatpush2.msra.mxu0 0.0
    %125 = vmatprep.subr.mxu0 0.0
    %126 = vmatpush2.msra.mxu0 0.0
    %127 = vmatprep.subr.mxu0 0.0
    %128 = vmatpush2.msra.mxu0 0.0
    %129 = vmatprep.subr.mxu0 0.0
    %130 = vmatpush2.msra.mxu0 0.0
    %131 = vmatprep.mubr.f32.mxu0 0.0
    %132 = vmatmul.mubr.f32.gmra.mxu0 %v62
    %v133 = vpop.f32.mrf.mxu0
    %v134 = vadd.f32 %v58, %v133
    %v135 = vpop.f32.mrf.mxu0
    %136 = vmatprep.mubr.f32.mxu0 0.0
    %137 = vmatmul.mubr.f32.gmra.mxu0 %v65
    %v138 = vpop.f32.mrf.mxu0
    %v139 = vadd.f32 %v58, %v138
    %v140 = vpop.f32.mrf.mxu0
    %141 = vdwg.mxu0
    %142 = vst [vmem:[#allocation7] sm:$0xff] %v134
    %143 = vst [vmem:[#allocation7 + $0x8] sm:$0xff] %v139
    // Predicated region
    $region22: #{tpu_custom_call.1} parent=1 // pred_check
      _
    $region23: #{tpu_custom_call.1} parent=1 // pred_check_branch
      %145 = sbr.rel (0) target = $region25
    $region24: #{tpu_custom_call.1} parent=1 // pred_region
      %s147 = ssub.s32 256, 256
      %148 = vsyncadd [#allocation4], %s147
      %s149 = sshll.u32 [#allocation7], 4
      %s150 = int_to_ptr.vmem [resolvable:$true] %s149
      %155 = dma.vmem_to_hbm [thread:$0]  %s150, 256, %s3, [#allocation4], 128, 128, 8
    $region25: #{tpu_custom_call.1} parent=1 // pred_fallthru
      _
    // Predicated region
    $region26: #{tpu_custom_call.1} parent=1 // pred_check
      _
    $region27: #{tpu_custom_call.1} parent=1 // pred_check_branch
      %157 = sbr.rel (0) target = $region29
    $region28: #{tpu_custom_call.1} parent=1 // pred_region
      %158 = dma.done [#allocation4], 256
    $region29: #{tpu_custom_call.1} parent=1 // pred_fallthru
      _
    %159 = vsyncpa [#allocation3], 1
    %160 = vsyncpa [#allocation6], 1
    %161 = vsyncpa [#allocation4], 1

// kernel: tpu_custom_call.1
$region0: #{tpu_custom_call.1}
  #allocation0 [shape = 'u32[]', space=smem, size = 0x4, offset = 0x4, fixed_abs, tag = 'smem constant byte address 0x4 - core index']
  #allocation1 [shape = 'u32[144,128]{1,0:T(1,128)}', space=vmem, size = 0x12000, scoped, tag = 'internal scratch']
  %s0 = inlined_call_operand.hbm [shape: f32[16,32], index: 0, kind: input, shape index: {}]
  %s1 = inlined_call_operand.hbm [shape: f32[32,128], index: 1, kind: input, shape index: {}]
  %s2 = inlined_call_operand.vmem [shape: f32[1,128], index: 2, kind: input, shape index: {}]
  %s3 = inlined_call_operand.hbm [shape: f32[16,128], index: 3, kind: output, shape index: {}]
  %s4 = sld [smem:[#allocation0]]
  $region30: #{tpu_custom_call.1} parent=0
    _
  %s6 = ssub.s32 1, %s4
  %s7 = scalar_select 0, %s6, %s4
  $region1: #{tpu_custom_call.1} parent=0
    #allocation2 [shape = 'u8[8192]{0}', space=vmem, size = 0x2000, scoped, tag = 'input window, operand 0, single buffered']
    #allocation3 [shape = 's32[1]{0}', space=sflag, size = 0x4, scoped, tag = 'scoped memory for tpu_custom_call.1']
    #allocation4 [shape = 's32[1]{0}', space=sflag, size = 0x4, scoped, tag = 'scoped memory for tpu_custom_call.1']
    #allocation5 [shape = 'u8[16384]{0}', space=vmem, size = 0x4000, scoped, tag = 'input window, operand 1, single buffered']
    #allocation6 [shape = 's32[1]{0}', space=sflag, size = 0x4, scoped, tag = 'scoped memory for tpu_custom_call.1']
    #allocation7 [shape = 'u8[8192]{0}', space=vmem, size = 0x2000, scoped, tag = 'output window, operand 0, single buffered']
    %8 = vsyncpa [#allocation3], 0
    %9 = vsyncpa [#allocation6], 0
    %10 = vsyncpa [#allocation4], 0
    // Predicated region
    $region2: #{tpu_custom_call.1} parent=1 // pred_check
      _
    $region3: #{tpu_custom_call.1} parent=1 // pred_check_branch
      %12 = sbr.rel (0) target = $region5
    $region4: #{tpu_custom_call.1} parent=1 // pred_region
      %s14 = ssub.s32 256, 256
      %15 = vsyncadd [#allocation3], %s14
      %s16 = sshll.u32 [#allocation2], 4
      %s17 = int_to_ptr.vmem [resolvable:$true] %s16
      %22 = dma.hbm_to_vmem [thread:$0]  %s0, 256, %s17, [#allocation3], 128, 128, 8
    $region5: #{tpu_custom_call.1} parent=1 // pred_fallthru
      _
    // Predicated region
    $region6: #{tpu_custom_call.1} parent=1 // pred_check
      _
    $region7: #{tpu_custom_call.1} parent=1 // pred_check_branch
      %24 = sbr.rel (0) target = $region9
    $region8: #{tpu_custom_call.1} parent=1 // pred_region
      %s26 = ssub.s32 512, 512
      %27 = vsyncadd [#allocation6], %s26
      %s28 = sshll.u32 [#allocation5], 4
      %s29 = int_to_ptr.vmem [resolvable:$true] %s28
      %34 = dma.hbm_to_vmem [thread:$0]  %s1, 512, %s29, [#allocation6], 128, 128, 8
    $region9: #{tpu_custom_call.1} parent=1 // pred_fallthru
      _
    // Predicated region
    $region10: #{tpu_custom_call.1} parent=1 // pred_check
      _
    $region11: #{tpu_custom_call.1} parent=1 // pred_check_branch
      %36 = sbr.rel (0) target = $region13
    $region12: #{tpu_custom_call.1} parent=1 // pred_region
      _
    $region13: #{tpu_custom_call.1} parent=1 // pred_fallthru
      _
    // Predicated region
    $region14: #{tpu_custom_call.1} parent=1 // pred_check
      _
    $region15: #{tpu_custom_call.1} parent=1 // pred_check_branch
      %38 = sbr.rel (0) target = $region17
    $region16: #{tpu_custom_call.1} parent=1 // pred_region
      %39 = dma.done [#allocation3], 256
    $region17: #{tpu_custom_call.1} parent=1 // pred_fallthru
      _
    // Predicated region
    $region18: #{tpu_custom_call.1} parent=1 // pred_check
      _
    $region19: #{tpu_custom_call.1} parent=1 // pred_check_branch
      %41 = sbr.rel (0) target = $region21
    $region20: #{tpu_custom_call.1} parent=1 // pred_region
      %42 = dma.done [#allocation6], 512
    $region21: #{tpu_custom_call.1} parent=1 // pred_fallthru
      _
    %v43 = vld [vmem:[#allocation2] sm:$0xff]
    %v44 = vld [vmem:[#allocation2 + $0x8] sm:$0xff]
    %v45 = vmax.f32 %v43, 0.0
    %v46 = vmax.f32 %v44, 0.0
    %v47 = vmin.f32 %v45, 20.0
    %v48 = vmin.f32 %v46, 20.0
    %v49 = vld [vmem:[#allocation5] sm:$0xff]
    %v50 = vld [vmem:[#allocation5 + $0x8] sm:$0xff]
    %v51 = vld [vmem:[#allocation5 + $0x10] sm:$0xff]
    %v52 = vld [vmem:[#allocation5 + $0x18] sm:$0xff]
    %v53 = vld [vmem:[%s2] sm:$0x1]
    %v55 = vlaneseq
    %v56 = vshrl.u32 %v55, 7
    %v57 = vsub.s32 0, %v56
    %v58 = vrot.slane %v53, %v57
    %vm60 = vcmask 261120
    %v62 = vsel %vm60, %v47, 0
    %v65 = vsel %vm60, %v48, 0
    %67 = vmatprep.subr.mxu0 0.0
    %68 = vmatpush1.msra.mxu0 0.0
    %69 = vmatprep.subr.mxu0 0.0
    %70 = vmatpush1.msra.mxu0 0.0
    %71 = vmatprep.subr.mxu0 0.0
    %72 = vmatpush1.msra.mxu0 0.0
    %73 = vmatprep.subr.mxu0 0.0
    %74 = vmatpush1.msra.mxu0 0.0
    %75 = vmatprep.subr.mxu0 0.0
    %76 = vmatpush1.msra.mxu0 0.0
    %77 = vmatprep.subr.mxu0 0.0
    %78 = vmatpush1.msra.mxu0 0.0
    %79 = vmatprep.subr.mxu0 0.0
    %80 = vmatpush1.msra.mxu0 0.0
    %81 = vmatprep.subr.mxu0 0.0
    %82 = vmatpush1.msra.mxu0 0.0
    %83 = vmatprep.subr.mxu0 0.0
    %84 = vmatpush1.msra.mxu0 0.0
    %85 = vmatprep.subr.mxu0 0.0
    %86 = vmatpush1.msra.mxu0 0.0
    %87 = vmatprep.subr.mxu0 0.0
    %88 = vmatpush1.msra.mxu0 0.0
    %89 = vmatprep.subr.mxu0 0.0
    %90 = vmatpush1.msra.mxu0 0.0
    %91 = vmatprep.subr.mxu0 0.0
    %92 = vmatpush1.msra.mxu0 %v52
    %93 = vmatprep.subr.mxu0 0.0
    %94 = vmatpush1.msra.mxu0 %v51
    %95 = vmatprep.subr.mxu0 0.0
    %96 = vmatpush1.msra.mxu0 %v50
    %97 = vmatprep.subr.mxu0 0.0
    %98 = vmatpush1.msra.mxu0 %v49
    %99 = vmatprep.subr.mxu0 0.0
    %100 = vmatpush2.msra.mxu0 0.0
    %101 = vmatprep.subr.mxu0 0.0
    %102 = vmatpush2.msra.mxu0 0.0
    %103 = vmatprep.subr.mxu0 0.0
    %104 = vmatpush2.msra.mxu0 0.0
    %105 = vmatprep.subr.mxu0 0.0
    %106 = vmatpush2.msra.mxu0 0.0
    %107 = vmatprep.subr.mxu0 0.0
    %108 = vmatpush2.msra.mxu0 0.0
    %109 = vmatprep.subr.mxu0 0.0
    %110 = vmatpush2.msra.mxu0 0.0
    %111 = vmatprep.subr.mxu0 0.0
    %112 = vmatpush2.msra.mxu0 0.0
    %113 = vmatprep.subr.mxu0 0.0
    %114 = vmatpush2.msra.mxu0 0.0
    %115 = vmatprep.subr.mxu0 0.0
    %116 = vmatpush2.msra.mxu0 0.0
    %117 = vmatprep.subr.mxu0 0.0
    %118 = vmatpush2.msra.mxu0 0.0
    %119 = vmatprep.subr.mxu0 0.0
    %120 = vmatpush2.msra.mxu0 0.0
    %121 = vmatprep.subr.mxu0 0.0
    %122 = vmatpush2.msra.mxu0 0.0
    %123 = vmatprep.subr.mxu0 0.0
    %124 = vmatpush2.msra.mxu0 0.0
    %125 = vmatprep.subr.mxu0 0.0
    %126 = vmatpush2.msra.mxu0 0.0
    %127 = vmatprep.subr.mxu0 0.0
    %128 = vmatpush2.msra.mxu0 0.0
    %129 = vmatprep.subr.mxu0 0.0
    %130 = vmatpush2.msra.mxu0 0.0
    %131 = vmatprep.mubr.f32.mxu0 0.0
    %132 = vmatmul.mubr.f32.gmra.mxu0 %v62
    %v133 = vpop.f32.mrf.mxu0
    %v134 = vadd.f32 %v58, %v133
    %v135 = vpop.f32.mrf.mxu0
    %136 = vmatprep.mubr.f32.mxu0 0.0
    %137 = vmatmul.mubr.f32.gmra.mxu0 %v65
    %v138 = vpop.f32.mrf.mxu0
    %v139 = vadd.f32 %v58, %v138
    %v140 = vpop.f32.mrf.mxu0
    %141 = vdwg.mxu0
    %142 = vst [vmem:[#allocation7] sm:$0xff] %v134
    %143 = vst [vmem:[#allocation7 + $0x8] sm:$0xff] %v139
    // Predicated region
    $region22: #{tpu_custom_call.1} parent=1 // pred_check
      _
    $region23: #{tpu_custom_call.1} parent=1 // pred_check_branch
      %145 = sbr.rel (0) target = $region25
    $region24: #{tpu_custom_call.1} parent=1 // pred_region
      %s147 = ssub.s32 256, 256
      %148 = vsyncadd [#allocation4], %s147
      %s149 = sshll.u32 [#allocation7], 4
      %s150 = int_to_ptr.vmem [resolvable:$true] %s149
      %155 = dma.vmem_to_hbm [thread:$0]  %s150, 256, %s3, [#allocation4], 128, 128, 8
    $region25: #{tpu_custom_call.1} parent=1 // pred_fallthru
      _
    // Predicated region
    $region26: #{tpu_custom_call.1} parent=1 // pred_check
      _
    $region27: #{tpu_custom_call.1} parent=1 // pred_check_branch
      %157 = sbr.rel (0) target = $region29
    $region28: #{tpu_custom_call.1} parent=1 // pred_region
      %158 = dma.done [#allocation4], 256
    $region29: #{tpu_custom_call.1} parent=1 // pred_fallthru
      _
    %159 = vsyncpa [#allocation3], 1
    %160 = vsyncpa [#allocation6], 1
    %161 = vsyncpa [#allocation4], 1

</llo_original>
